<compile_context>
chip_gen: v5e
topology: v5e:2x2
jax: 0.10.0
libtpu: 0.0.40
codegen_flags: <defaults>
</compile_context>

<pallas_src>
import functools

import jax
import jax.numpy as jnp
from jax.experimental import pallas as pl
from jax.experimental.pallas import tpu as pltpu


def _round_up(x, m):
    return ((x + m - 1) // m) * m


# ---------------------------------------------------------------------------
# Kernel 1: fused node transform  (one MXU matmul per node tile)
#   y = x @ [W_msg | W_self | w_att_blk] + [b_msg | b_self | b_att_blk]
#   h        = y[:, :Cpad]
#   self_out = y[:, Cpad:2*Cpad]
#   s        = leaky_relu(y[:, 2*Cpad:], 0.2)   (logit in lane 0, zeros elsewhere)
# ---------------------------------------------------------------------------
def _node_transform_kernel(x_ref, w_ref, b_ref, h_ref, self_ref, s_ref, *, cpad):
    y = jnp.dot(x_ref[...], w_ref[...], preferred_element_type=jnp.float32)
    y = y + b_ref[...]
    h_ref[...] = y[:, :cpad]
    self_ref[...] = y[:, cpad:2 * cpad]
    s_raw = y[:, 2 * cpad:]
    s_ref[...] = jnp.where(s_raw >= 0.0, s_raw, 0.2 * s_raw)   # leaky_relu(0.2)


# ---------------------------------------------------------------------------
# Kernel 2: segment softmax + elementwise-min aggregation + self term.
# Grid = (node tiles [parallel], edge tiles [arbitrary]).
# Online (flash-style) rescaling: for a fixed target, min_j(h_j * alpha_j)
#   = (1/(l+eps)) * min_j(h_j * exp(s_j - m)), and positive rescales commute
#   with elementwise min, so a single pass over edges suffices.
# ---------------------------------------------------------------------------
def _min_attention_agg_kernel(src_ref, tgt_ref,            # scalar prefetch (SMEM)
                              h_ref, s_ref, self_ref,      # inputs (VMEM)
                              o_ref,                       # output (VMEM, resident)
                              acc_ref, m_ref, l_ref, cnt_ref,   # scratch
                              *, node_tile, edge_tile):
    ni = pl.program_id(0)
    ei = pl.program_id(1)
    n0 = ni * node_tile

    @pl.when(ei == 0)
    def _init():
        acc_ref[...] = jnp.full_like(acc_ref, jnp.inf)      # running min
        m_ref[...] = jnp.full_like(m_ref, -jnp.inf)         # running max logit
        l_ref[...] = jnp.zeros_like(l_ref)                  # running sum of exp
        cnt_ref[...] = jnp.zeros_like(cnt_ref)              # incoming edge count

    e_base = ei * edge_tile

    @pl.loop(0, edge_tile)
    def _edge(t):
        e = e_base + t
        tgt_e = tgt_ref[e]                                  # SMEM scalar read
        src_e = src_ref[e]
        # Padded edges carry tgt = -1 and are skipped; out-of-range node ids are
        # assumed absent (same contract as JAX segment ops / the reference).
        in_tile = jnp.logical_and(tgt_e >= n0, tgt_e < n0 + node_tile)

        @pl.when(in_tile)
        def _process():
            r = tgt_e - n0
            h_e = h_ref[pl.ds(src_e, 1), :]                 # (1, Cpad) gathered message
            s_e = s_ref[pl.ds(src_e, 1), pl.ds(0, 1)]       # (1, 1) attention logit
            cnt_old = cnt_ref[pl.ds(r, 1), :]
            m_old = m_ref[pl.ds(r, 1), :]
            m_new = jnp.maximum(m_old, s_e)
            scale = jnp.exp(m_old - m_new)                  # in (0,1]; 0 on first edge
            p = jnp.exp(s_e - m_new)
            l_ref[pl.ds(r, 1), :] = l_ref[pl.ds(r, 1), :] * scale + p
            acc_old = acc_ref[pl.ds(r, 1), :]
            # keep the select on the inf path: inf * 0 would be NaN on the first edge
            acc_scaled = jnp.where(cnt_old == 0.0, jnp.inf, acc_old * scale)
            acc_ref[pl.ds(r, 1), :] = jnp.minimum(acc_scaled, h_e * p)
            m_ref[pl.ds(r, 1), :] = m_new
            cnt_ref[pl.ds(r, 1), :] = cnt_old + 1.0

    @pl.when(ei == pl.num_programs(1) - 1)
    def _finalize():
        has_edge = cnt_ref[...] > 0.0
        agg = acc_ref[...] / (l_ref[...] + jnp.float32(1e-16))   # PyG softmax +1e-16
        o_ref[...] = jnp.where(has_edge, agg, 0.0) + self_ref[...]


# ---------------------------------------------------------------------------
# Wrapper
# ---------------------------------------------------------------------------
def general_conv_min_attention(x, edge_index, params, *, node_tile=128, edge_tile=128):
    x = jnp.asarray(x, jnp.float32)
    n_nodes, f_in = x.shape
    c = params["w_msg"].shape[1]
    num_edges = edge_index.shape[1]

    cpad = _round_up(c, 128)                  # lane-dense output channels
    npad = _round_up(n_nodes, node_tile)
    epad = _round_up(num_edges, edge_tile)
    w_tot = 2 * cpad + 128

    # ---- pad / pack parameters; fold attention vector into the fused weight ----
    w_msg = jnp.zeros((f_in, cpad), jnp.float32).at[:, :c].set(params["w_msg"])
    w_self = jnp.zeros((f_in, cpad), jnp.float32).at[:, :c].set(params["w_self"])
    b_msg = jnp.zeros((1, cpad), jnp.float32).at[:, :c].set(params["b_msg"])
    b_self = jnp.zeros((1, cpad), jnp.float32).at[:, :c].set(params["b_self"])
    att = jnp.zeros((1, cpad), jnp.float32).at[:, :c].set(params["att"])

    # s_raw = sum((x@W_msg + b_msg) * att) == x @ (W_msg att^T) + <b_msg, att>
    w_att = w_msg @ att.T                                        # (f_in, 1)
    b_att = jnp.sum(b_msg * att)                                 # scalar
    att_blk_w = jnp.zeros((f_in, 128), jnp.float32).at[:, :1].set(w_att)
    att_blk_b = jnp.zeros((1, 128), jnp.float32).at[0, 0].set(b_att)

    w_cat = jnp.concatenate([w_msg, w_self, att_blk_w], axis=1)  # (f_in, 2*Cpad+128)
    b_cat = jnp.concatenate([b_msg, b_self, att_blk_b], axis=1)  # (1, 2*Cpad+128)

    x_p = jnp.zeros((npad, f_in), jnp.float32).at[:n_nodes, :].set(x)

    num_node_tiles = npad // node_tile
    num_edge_tiles = epad // edge_tile

    # ---- kernel 1: fused node transform (node-tiled, parallel) ----
    h, self_out, s = pl.pallas_call(
        functools.partial(_node_transform_kernel, cpad=cpad),
        out_shape=(
            jax.ShapeDtypeStruct((npad, cpad), jnp.float32),
            jax.ShapeDtypeStruct((npad, cpad), jnp.float32),
            jax.ShapeDtypeStruct((npad, 128), jnp.float32),
        ),
        grid_spec=pltpu.PrefetchScalarGridSpec(
            num_scalar_prefetch=0,
            grid=(num_node_tiles,),
            in_specs=[
                pl.BlockSpec((node_tile, f_in), lambda i: (i, 0)),
                pl.BlockSpec((f_in, w_tot), lambda i: (0, 0)),
                pl.BlockSpec((1, w_tot), lambda i: (0, 0)),
            ],
            out_specs=[
                pl.BlockSpec((node_tile, cpad), lambda i: (i, 0)),
                pl.BlockSpec((node_tile, cpad), lambda i: (i, 0)),
                pl.BlockSpec((node_tile, 128), lambda i: (i, 0)),
            ],
        ),
        compiler_params=pltpu.CompilerParams(
            dimension_semantics=("parallel",),
            vmem_limit_bytes=32 * 1024 * 1024,
        ),
        cost_estimate=pl.CostEstimate(
            flops=2 * npad * f_in * w_tot,
            transcendentals=0,
            bytes_accessed=4 * (npad * f_in + f_in * w_tot + npad * (2 * cpad + 128)),
        ),
    )(x_p, w_cat, b_cat)

    # ---- edge index: 1-D int32 arrays in SMEM via scalar prefetch ----
    src = jnp.asarray(edge_index[0], jnp.int32)
    tgt = jnp.asarray(edge_index[1], jnp.int32)
    src_p = jnp.zeros((epad,), jnp.int32).at[:num_edges].set(src)
    tgt_p = jnp.full((epad,), -1, jnp.int32).at[:num_edges].set(tgt)   # -1 = padding

    # ---- kernel 2: segment softmax + min aggregation + self term ----
    out = pl.pallas_call(
        functools.partial(_min_attention_agg_kernel,
                          node_tile=node_tile, edge_tile=edge_tile),
        out_shape=jax.ShapeDtypeStruct((npad, cpad), jnp.float32),
        grid_spec=pltpu.PrefetchScalarGridSpec(
            num_scalar_prefetch=2,
            grid=(num_node_tiles, num_edge_tiles),
            in_specs=[
                # TODO(synk): for very large N, h / s should be DMA-gathered per edge
                # tile instead of held fully resident in VMEM.
                pl.BlockSpec((npad, cpad), lambda ni, ei, s_r, t_r: (0, 0)),   # h
                pl.BlockSpec((npad, 128), lambda ni, ei, s_r, t_r: (0, 0)),    # s
                pl.BlockSpec((node_tile, cpad), lambda ni, ei, s_r, t_r: (ni, 0)),  # self
            ],
            out_specs=pl.BlockSpec((node_tile, cpad), lambda ni, ei, s_r, t_r: (ni, 0)),
            scratch_shapes=[
                pltpu.VMEM((node_tile, cpad), jnp.float32),   # acc (running min)
                pltpu.VMEM((node_tile, 1), jnp.float32),      # m (running max logit)
                pltpu.VMEM((node_tile, 1), jnp.float32),      # l (running sum exp)
                pltpu.VMEM((node_tile, 1), jnp.float32),      # cnt (incoming edges)
            ],
        ),
        compiler_params=pltpu.CompilerParams(
            dimension_semantics=("parallel", "arbitrary"),
            vmem_limit_bytes=32 * 1024 * 1024,
        ),
        cost_estimate=pl.CostEstimate(
            flops=6 * epad * cpad * num_node_tiles,
            transcendentals=2 * epad * num_node_tiles,
            bytes_accessed=4 * (3 * npad * cpad + npad * 128 + 2 * epad),
        ),
    )(src_p, tgt_p, h, s, self_out)

    return out[:n_nodes, :c]


def reference(x, edge_index, params):
    """Pure-JAX reference of the same forward pass (for verification)."""
    N = x.shape[0]
    src, tgt = edge_index[0], edge_index[1]
    h = x @ params["w_msg"] + params["b_msg"]                     # (N, C)
    s = jnp.sum(h * params["att"], axis=-1)                       # (N,)
    s = jnp.where(s >= 0.0, s, 0.2 * s)
    s_e = s[src]
    max_t = jax.ops.segment_max(s_e, tgt, num_segments=N)
    exp_e = jnp.exp(s_e - max_t[tgt])
    den_t = jax.ops.segment_sum(exp_e, tgt, num_segments=N) + 1e-16
    alpha = exp_e / den_t[tgt]
    msg = h[src] * alpha[:, None]
    agg = jax.ops.segment_min(msg, tgt, num_segments=N)
    cnt = jax.ops.segment_sum(jnp.ones_like(s_e), tgt, num_segments=N)
    agg = jnp.where(cnt[:, None] > 0, agg, 0.0)
    return agg + x @ params["w_self"] + params["b_self"]


if __name__ == "__main__":
    N_NODES, F_IN, F_OUT, N_EDGES = 8, 16, 32, 16

    key = jax.random.PRNGKey(0)
    kx, ksrc, ktgt, k1, k2, k3, k4, k5 = jax.random.split(key, 8)

    x = jax.random.normal(kx, (N_NODES, F_IN), dtype=jnp.float32)

    # edge_index: every node receives at least one edge
    src = jax.random.randint(ksrc, (N_EDGES,), 0, N_NODES, dtype=jnp.int32)
    tgt = jnp.concatenate([
        jnp.arange(N_NODES, dtype=jnp.int32),
        jax.random.randint(ktgt, (N_EDGES - N_NODES,), 0, N_NODES, dtype=jnp.int32),
    ])
    edge_index = jnp.stack([src, tgt], axis=0)                     # (2, E) int32

    # shapes from GeneralConv: lin_msg, lin_self, att_msg
    params = {
        "w_msg": 0.2 * jax.random.normal(k1, (F_IN, F_OUT), dtype=jnp.float32),
        "b_msg": 0.1 * jax.random.normal(k2, (1, F_OUT), dtype=jnp.float32),
        "att":   0.2 * jax.random.normal(k3, (1, F_OUT), dtype=jnp.float32),
        "w_self": 0.2 * jax.random.normal(k4, (F_IN, F_OUT), dtype=jnp.float32),
        "b_self": 0.1 * jax.random.normal(k5, (1, F_OUT), dtype=jnp.float32),
    }

    out = general_conv_min_attention(x, edge_index, params)
    out = jax.block_until_ready(out)

    ref = reference(x, edge_index, params)
    assert out.shape == (N_NODES, F_OUT)
    assert jnp.allclose(out, ref, atol=1e-4, rtol=1e-4), "mismatch vs JAX reference"

    print("KERNEL_OK")
</pallas_src>

<mosaic_0001>
module attributes {stable_mosaic.version = 11 : i64} {
  func.func @_node_transform_kernel(%arg0: i32, %arg1: memref<128x16xf32, #tpu.memory_space<vmem>>, %arg2: memref<16x384xf32, #tpu.memory_space<vmem>>, %arg3: memref<1x384xf32, #tpu.memory_space<vmem>>, %arg4: memref<128x128xf32, #tpu.memory_space<vmem>>, %arg5: memref<128x128xf32, #tpu.memory_space<vmem>>, %arg6: memref<128x128xf32, #tpu.memory_space<vmem>>) attributes {dimension_semantics = [#tpu.dimension_semantics<parallel>], iteration_bounds = array<i64: 1>, scalar_prefetch = 0 : i64, scratch_operands = 0 : i64, tpu.core_type = #tpu.core_type<tc>, window_params = [{transform_indices = @transform_0, window_bounds = array<i64: 128, 16>}, {pipeline_mode = #tpu.pipeline_mode<synchronous>, transform_indices = @transform_1, window_bounds = array<i64: 16, 384>}, {pipeline_mode = #tpu.pipeline_mode<synchronous>, transform_indices = @transform_2, window_bounds = array<i64: 1, 384>}, {transform_indices = @transform_3, window_bounds = array<i64: 128, 128>}, {transform_indices = @transform_4, window_bounds = array<i64: 128, 128>}, {transform_indices = @transform_5, window_bounds = array<i64: 128, 128>}]} {
    %c0 = arith.constant 0 : index
    %c0_0 = arith.constant 0 : index
    %0 = vector.load %arg1[%c0, %c0_0] : memref<128x16xf32, #tpu.memory_space<vmem>>, vector<128x16xf32>
    %c0_1 = arith.constant 0 : index
    %c0_2 = arith.constant 0 : index
    %1 = vector.load %arg2[%c0_1, %c0_2] : memref<16x384xf32, #tpu.memory_space<vmem>>, vector<16x384xf32>
    %cst = arith.constant dense<0.000000e+00> : vector<128x384xf32>
    %2 = tpu.matmul %0, %1, %cst {dimension_numbers = #tpu.dot_dimension_numbers<[1], [0], [0], [1], [0, 0, 1, 1], [], []>} : vector<128x16xf32>, vector<16x384xf32>, vector<128x384xf32> -> vector<128x384xf32>
    %c0_3 = arith.constant 0 : index
    %c0_4 = arith.constant 0 : index
    %3 = vector.load %arg3[%c0_3, %c0_4] : memref<1x384xf32, #tpu.memory_space<vmem>>, vector<1x384xf32>
    %4 = vector.broadcast %3 : vector<1x384xf32> to vector<128x384xf32>
    %5 = arith.addf %2, %4 : vector<128x384xf32>
    %6 = vector.extract_strided_slice %5 {offsets = [0, 0], sizes = [128, 128], strides = [1, 1]} : vector<128x384xf32> to vector<128x128xf32>
    %c0_5 = arith.constant 0 : index
    %c0_6 = arith.constant 0 : index
    %7 = vector.load %arg4[%c0_5, %c0_6] : memref<128x128xf32, #tpu.memory_space<vmem>>, vector<128x128xf32>
    tpu.vector_store %arg4[%c0_5, %c0_6], %6 {strides = array<i32>} : memref<128x128xf32, #tpu.memory_space<vmem>>, vector<128x128xf32>,
    %8 = vector.extract_strided_slice %5 {offsets = [0, 128], sizes = [128, 128], strides = [1, 1]} : vector<128x384xf32> to vector<128x128xf32>
    %c0_7 = arith.constant 0 : index
    %c0_8 = arith.constant 0 : index
    %9 = vector.load %arg5[%c0_7, %c0_8] : memref<128x128xf32, #tpu.memory_space<vmem>>, vector<128x128xf32>
    tpu.vector_store %arg5[%c0_7, %c0_8], %8 {strides = array<i32>} : memref<128x128xf32, #tpu.memory_space<vmem>>, vector<128x128xf32>,
    %10 = vector.extract_strided_slice %5 {offsets = [0, 256], sizes = [128, 128], strides = [1, 1]} : vector<128x384xf32> to vector<128x128xf32>
    %cst_9 = arith.constant 0.000000e+00 : f32
    %11 = vector.broadcast %cst_9 : f32 to vector<128x128xf32>
    %12 = arith.cmpf oge, %10, %11 : vector<128x128xf32>
    %cst_10 = arith.constant 2.000000e-01 : f32
    %13 = vector.broadcast %cst_10 : f32 to vector<128x128xf32>
    %14 = arith.mulf %13, %10 : vector<128x128xf32>
    %15 = arith.select %12, %10, %14 : vector<128x128xi1>, vector<128x128xf32>
    %c0_11 = arith.constant 0 : index
    %c0_12 = arith.constant 0 : index
    %16 = vector.load %arg6[%c0_11, %c0_12] : memref<128x128xf32, #tpu.memory_space<vmem>>, vector<128x128xf32>
    tpu.vector_store %arg6[%c0_11, %c0_12], %15 {strides = array<i32>} : memref<128x128xf32, #tpu.memory_space<vmem>>, vector<128x128xf32>,
    return
  }
  func.func @transform_0(%arg0: i32) -> (i32, i32) {
    %c0_i32 = arith.constant 0 : i32
    %c0_i32_0 = arith.constant 0 : i32
    return %arg0, %c0_i32 : i32, i32
  }
  func.func @transform_1(%arg0: i32) -> (i32, i32) {
    %c0_i32 = arith.constant 0 : i32
    %c0_i32_0 = arith.constant 0 : i32
    %c0_i32_1 = arith.constant 0 : i32
    return %c0_i32, %c0_i32_0 : i32, i32
  }
  func.func @transform_2(%arg0: i32) -> (i32, i32) {
    %c0_i32 = arith.constant 0 : i32
    %c0_i32_0 = arith.constant 0 : i32
    %c0_i32_1 = arith.constant 0 : i32
    return %c0_i32, %c0_i32_0 : i32, i32
  }
  func.func @transform_3(%arg0: i32) -> (i32, i32) {
    %c0_i32 = arith.constant 0 : i32
    %c0_i32_0 = arith.constant 0 : i32
    return %arg0, %c0_i32 : i32, i32
  }
  func.func @transform_4(%arg0: i32) -> (i32, i32) {
    %c0_i32 = arith.constant 0 : i32
    %c0_i32_0 = arith.constant 0 : i32
    return %arg0, %c0_i32 : i32, i32
  }
  func.func @transform_5(%arg0: i32) -> (i32, i32) {
    %c0_i32 = arith.constant 0 : i32
    %c0_i32_0 = arith.constant 0 : i32
    return %arg0, %c0_i32 : i32, i32
  }
}

</mosaic_0001>

<llo_original>
// kernel: tpu_custom_call.1
$region0: #{tpu_custom_call.1}
  #allocation0 [shape = 'u32[]', space=smem, size = 0x4, offset = 0x4, fixed_abs, tag = 'smem constant byte address 0x4 - core index']
  #allocation1 [shape = 'u32[72,128]{1,0:T(1,128)}', space=vmem, size = 0x9000, scoped, tag = 'internal scratch']
  %s0 = inlined_call_operand.vmem [shape: f32[128,16], index: 0, kind: input, shape index: {}]
  %s1 = inlined_call_operand.vmem [shape: f32[16,384], index: 1, kind: input, shape index: {}]
  %s2 = inlined_call_operand.vmem [shape: f32[1,384], index: 2, kind: input, shape index: {}]
  %s3 = inlined_call_operand.hbm [shape: f32[128,128], index: 3, kind: output, shape index: {0}]
  %s4 = inlined_call_operand.hbm [shape: f32[128,128], index: 4, kind: output, shape index: {1}]
  %s5 = inlined_call_operand.hbm [shape: f32[128,128], index: 5, kind: output, shape index: {2}]
  %6 = xla_tuple %s3, %s4, %s5
  %s7 = sld [smem:[#allocation0]]
  $region38: #{tpu_custom_call.1} parent=0
    _
  %s9 = ssub.s32 1, %s7
  %s10 = scalar_select 0, %s9, %s7
  $region1: #{tpu_custom_call.1} parent=0
    #allocation2 [shape = 'u8[65536]{0}', space=vmem, size = 0x10000, scoped, tag = 'output window, operand 0, single buffered']
    #allocation3 [shape = 's32[1]{0}', space=sflag, size = 0x4, scoped, tag = 'scoped memory for tpu_custom_call.1']
    #allocation4 [shape = 'u8[65536]{0}', space=vmem, size = 0x10000, scoped, tag = 'output window, operand 1, single buffered']
    #allocation5 [shape = 's32[1]{0}', space=sflag, size = 0x4, scoped, tag = 'scoped memory for tpu_custom_call.1']
    #allocation6 [shape = 'u8[65536]{0}', space=vmem, size = 0x10000, scoped, tag = 'output window, operand 2, single buffered']
    %11 = vsyncpa [#allocation3], 0
    %12 = vsyncpa [#allocation5], 0
    // Predicated region
    $region2: #{tpu_custom_call.1} parent=1 // pred_check
      _
    $region3: #{tpu_custom_call.1} parent=1 // pred_check_branch
      %14 = sbr.rel (0) target = $region5
    $region4: #{tpu_custom_call.1} parent=1 // pred_region
      _
    $region5: #{tpu_custom_call.1} parent=1 // pred_fallthru
      _
    // Predicated region
    $region6: #{tpu_custom_call.1} parent=1 // pred_check
      _
    $region7: #{tpu_custom_call.1} parent=1 // pred_check_branch
      %16 = sbr.rel (0) target = $region9
    $region8: #{tpu_custom_call.1} parent=1 // pred_region
      _
    $region9: #{tpu_custom_call.1} parent=1 // pred_fallthru
      _
    // Predicated region
    $region10: #{tpu_custom_call.1} parent=1 // pred_check
      _
    $region11: #{tpu_custom_call.1} parent=1 // pred_check_branch
      %18 = sbr.rel (0) target = $region13
    $region12: #{tpu_custom_call.1} parent=1 // pred_region
      _
    $region13: #{tpu_custom_call.1} parent=1 // pred_fallthru
      _
    %v19 = vld [vmem:[%s0] sm:$0xff]
    %v20 = vld [vmem:[%s0 + $0x8] sm:$0xff]
    %v21 = vld [vmem:[%s0 + $0x10] sm:$0xff]
    %v22 = vld [vmem:[%s0 + $0x18] sm:$0xff]
    %v23 = vld [vmem:[%s0 + $0x20] sm:$0xff]
    %v24 = vld [vmem:[%s0 + $0x28] sm:$0xff]
    %v25 = vld [vmem:[%s0 + $0x30] sm:$0xff]
    %v26 = vld [vmem:[%s0 + $0x38] sm:$0xff]
    %v27 = vld [vmem:[%s0 + $0x40] sm:$0xff]
    %v28 = vld [vmem:[%s0 + $0x48] sm:$0xff]
    %v29 = vld [vmem:[%s0 + $0x50] sm:$0xff]
    %v30 = vld [vmem:[%s0 + $0x58] sm:$0xff]
    %v31 = vld [vmem:[%s0 + $0x60] sm:$0xff]
    %v32 = vld [vmem:[%s0 + $0x68] sm:$0xff]
    %v33 = vld [vmem:[%s0 + $0x70] sm:$0xff]
    %v34 = vld [vmem:[%s0 + $0x78] sm:$0xff]
    %v35 = vld [vmem:[%s1] sm:$0xff]
    %v36 = vld [vmem:[%s1 + $0x8] sm:$0xff]
    %v37 = vld [vmem:[%s1 + $0x10] sm:$0xff]
    %v38 = vld [vmem:[%s1 + $0x18] sm:$0xff]
    %v39 = vld [vmem:[%s1 + $0x20] sm:$0xff]
    %v40 = vld [vmem:[%s1 + $0x28] sm:$0xff]
    %v41 = vld [vmem:[%s2] sm:$0x7]
    %v43 = vperm.slane %v41, 0
    %v44 = vperm.slane %v41, 1
    %v45 = vperm.slane %v41, 2
    %vm49 = vcmask 130048
    %v51 = vsel %vm49, %v19, 0
    %v54 = vsel %vm49, %v20, 0
    %v57 = vsel %vm49, %v21, 0
    %v60 = vsel %vm49, %v22, 0
    %v63 = vsel %vm49, %v23, 0
    %v66 = vsel %vm49, %v24, 0
    %v69 = vsel %vm49, %v25, 0
    %v72 = vsel %vm49, %v26, 0
    %v75 = vsel %vm49, %v27, 0
    %v78 = vsel %vm49, %v28, 0
    %v81 = vsel %vm49, %v29, 0
    %v84 = vsel %vm49, %v30, 0
    %v87 = vsel %vm49, %v31, 0
    %v90 = vsel %vm49, %v32, 0
    %v93 = vsel %vm49, %v33, 0
    %v96 = vsel %vm49, %v34, 0
    %98 = vmatpush.msra.mxu0 0.0
    %99 = vmatpush.msra.mxu0 0.0
    %100 = vmatpush.msra.mxu0 0.0
    %101 = vmatpush.msra.mxu0 0.0
    %102 = vmatpush.msra.mxu0 0.0
    %103 = vmatpush.msra.mxu0 0.0
    %104 = vmatpush.msra.mxu0 0.0
    %105 = vmatpush.msra.mxu0 0.0
    %106 = vmatpush.msra.mxu0 0.0
    %107 = vmatpush.msra.mxu0 0.0
    %108 = vmatpush.msra.mxu0 0.0
    %109 = vmatpush.msra.mxu0 0.0
    %110 = vmatpush.msra.mxu0 0.0
    %111 = vmatpush.msra.mxu0 0.0
    %112 = vmatpush.msra.mxu0 %v38
    %113 = vmatpush.msra.mxu0 %v35
    %114 = vmatmul.f32.gmra.mxu0 %v51
    %v115 = vpop.f32.mrf.mxu0
    %v116 = vadd.f32 %v43, %v115
    %117 = vmatmul.f32.gmra.mxu0 %v54
    %v118 = vpop.f32.mrf.mxu0
    %v119 = vadd.f32 %v43, %v118
    %120 = vmatmul.f32.gmra.mxu0 %v57
    %v121 = vpop.f32.mrf.mxu0
    %v122 = vadd.f32 %v43, %v121
    %123 = vmatmul.f32.gmra.mxu0 %v60
    %v124 = vpop.f32.mrf.mxu0
    %v125 = vadd.f32 %v43, %v124
    %126 = vmatmul.f32.gmra.mxu0 %v63
    %v127 = vpop.f32.mrf.mxu0
    %v128 = vadd.f32 %v43, %v127
    %129 = vmatmul.f32.gmra.mxu0 %v66
    %v130 = vpop.f32.mrf.mxu0
    %v131 = vadd.f32 %v43, %v130
    %132 = vmatmul.f32.gmra.mxu0 %v69
    %v133 = vpop.f32.mrf.mxu0
    %v134 = vadd.f32 %v43, %v133
    %135 = vmatmul.f32.gmra.mxu0 %v72
    %v136 = vpop.f32.mrf.mxu0
    %v137 = vadd.f32 %v43, %v136
    %138 = vmatmul.f32.gmra.mxu0 %v75
    %v139 = vpop.f32.mrf.mxu0
    %v140 = vadd.f32 %v43, %v139
    %141 = vmatmul.f32.gmra.mxu0 %v78
    %v142 = vpop.f32.mrf.mxu0
    %v143 = vadd.f32 %v43, %v142
    %144 = vmatmul.f32.gmra.mxu0 %v81
    %v145 = vpop.f32.mrf.mxu0
    %v146 = vadd.f32 %v43, %v145
    %147 = vmatmul.f32.gmra.mxu0 %v84
    %v148 = vpop.f32.mrf.mxu0
    %v149 = vadd.f32 %v43, %v148
    %150 = vmatmul.f32.gmra.mxu0 %v87
    %v151 = vpop.f32.mrf.mxu0
    %v152 = vadd.f32 %v43, %v151
    %153 = vmatmul.f32.gmra.mxu0 %v90
    %v154 = vpop.f32.mrf.mxu0
    %v155 = vadd.f32 %v43, %v154
    %156 = vmatmul.f32.gmra.mxu0 %v93
    %v157 = vpop.f32.mrf.mxu0
    %v158 = vadd.f32 %v43, %v157
    %159 = vmatmul.f32.gmra.mxu0 %v96
    %v160 = vpop.f32.mrf.mxu0
    %v161 = vadd.f32 %v43, %v160
    %162 = vdwg.mxu0
    %163 = vmatpush.msra.mxu0 0.0
    %164 = vmatpush.msra.mxu0 0.0
    %165 = vmatpush.msra.mxu0 0.0
    %166 = vmatpush.msra.mxu0 0.0
    %167 = vmatpush.msra.mxu0 0.0
    %168 = vmatpush.msra.mxu0 0.0
    %169 = vmatpush.msra.mxu0 0.0
    %170 = vmatpush.msra.mxu0 0.0
    %171 = vmatpush.msra.mxu0 0.0
    %172 = vmatpush.msra.mxu0 0.0
    %173 = vmatpush.msra.mxu0 0.0
    %174 = vmatpush.msra.mxu0 0.0
    %175 = vmatpush.msra.mxu0 0.0
    %176 = vmatpush.msra.mxu0 0.0
    %177 = vmatpush.msra.mxu0 %v39
    %178 = vmatpush.msra.mxu0 %v36
    %179 = vmatmul.f32.gmra.mxu0 %v51
    %v180 = vpop.f32.mrf.mxu0
    %v181 = vadd.f32 %v44, %v180
    %182 = vmatmul.f32.gmra.mxu0 %v54
    %v183 = vpop.f32.mrf.mxu0
    %v184 = vadd.f32 %v44, %v183
    %185 = vmatmul.f32.gmra.mxu0 %v57
    %v186 = vpop.f32.mrf.mxu0
    %v187 = vadd.f32 %v44, %v186
    %188 = vmatmul.f32.gmra.mxu0 %v60
    %v189 = vpop.f32.mrf.mxu0
    %v190 = vadd.f32 %v44, %v189
    %191 = vmatmul.f32.gmra.mxu0 %v63
    %v192 = vpop.f32.mrf.mxu0
    %v193 = vadd.f32 %v44, %v192
    %194 = vmatmul.f32.gmra.mxu0 %v66
    %v195 = vpop.f32.mrf.mxu0
    %v196 = vadd.f32 %v44, %v195
    %197 = vmatmul.f32.gmra.mxu0 %v69
    %v198 = vpop.f32.mrf.mxu0
    %v199 = vadd.f32 %v44, %v198
    %200 = vmatmul.f32.gmra.mxu0 %v72
    %v201 = vpop.f32.mrf.mxu0
    %v202 = vadd.f32 %v44, %v201
    %203 = vmatmul.f32.gmra.mxu0 %v75
    %v204 = vpop.f32.mrf.mxu0
    %v205 = vadd.f32 %v44, %v204
    %206 = vmatmul.f32.gmra.mxu0 %v78
    %v207 = vpop.f32.mrf.mxu0
    %v208 = vadd.f32 %v44, %v207
    %209 = vmatmul.f32.gmra.mxu0 %v81
    %v210 = vpop.f32.mrf.mxu0
    %v211 = vadd.f32 %v44, %v210
    %212 = vmatmul.f32.gmra.mxu0 %v84
    %v213 = vpop.f32.mrf.mxu0
    %v214 = vadd.f32 %v44, %v213
    %215 = vmatmul.f32.gmra.mxu0 %v87
    %v216 = vpop.f32.mrf.mxu0
    %v217 = vadd.f32 %v44, %v216
    %218 = vmatmul.f32.gmra.mxu0 %v90
    %v219 = vpop.f32.mrf.mxu0
    %v220 = vadd.f32 %v44, %v219
    %221 = vmatmul.f32.gmra.mxu0 %v93
    %v222 = vpop.f32.mrf.mxu0
    %v223 = vadd.f32 %v44, %v222
    %224 = vmatmul.f32.gmra.mxu0 %v96
    %v225 = vpop.f32.mrf.mxu0
    %v226 = vadd.f32 %v44, %v225
    %227 = vdwg.mxu0
    %228 = vmatpush.msra.mxu0 0.0
    %229 = vmatpush.msra.mxu0 0.0
    %230 = vmatpush.msra.mxu0 0.0
    %231 = vmatpush.msra.mxu0 0.0
    %232 = vmatpush.msra.mxu0 0.0
    %233 = vmatpush.msra.mxu0 0.0
    %234 = vmatpush.msra.mxu0 0.0
    %235 = vmatpush.msra.mxu0 0.0
    %236 = vmatpush.msra.mxu0 0.0
    %237 = vmatpush.msra.mxu0 0.0
    %238 = vmatpush.msra.mxu0 0.0
    %239 = vmatpush.msra.mxu0 0.0
    %240 = vmatpush.msra.mxu0 0.0
    %241 = vmatpush.msra.mxu0 0.0
    %242 = vmatpush.msra.mxu0 %v40
    %243 = vmatpush.msra.mxu0 %v37
    %244 = vmatmul.f32.gmra.mxu0 %v51
    %v245 = vpop.f32.mrf.mxu0
    %v246 = vadd.f32 %v45, %v245
    %247 = vmatmul.f32.gmra.mxu0 %v54
    %v248 = vpop.f32.mrf.mxu0
    %v249 = vadd.f32 %v45, %v248
    %250 = vmatmul.f32.gmra.mxu0 %v57
    %v251 = vpop.f32.mrf.mxu0
    %v252 = vadd.f32 %v45, %v251
    %253 = vmatmul.f32.gmra.mxu0 %v60
    %v254 = vpop.f32.mrf.mxu0
    %v255 = vadd.f32 %v45, %v254
    %256 = vmatmul.f32.gmra.mxu0 %v63
    %v257 = vpop.f32.mrf.mxu0
    %v258 = vadd.f32 %v45, %v257
    %259 = vmatmul.f32.gmra.mxu0 %v66
    %v260 = vpop.f32.mrf.mxu0
    %v261 = vadd.f32 %v45, %v260
    %262 = vmatmul.f32.gmra.mxu0 %v69
    %v263 = vpop.f32.mrf.mxu0
    %v264 = vadd.f32 %v45, %v263
    %265 = vmatmul.f32.gmra.mxu0 %v72
    %v266 = vpop.f32.mrf.mxu0
    %v267 = vadd.f32 %v45, %v266
    %268 = vmatmul.f32.gmra.mxu0 %v75
    %v269 = vpop.f32.mrf.mxu0
    %v270 = vadd.f32 %v45, %v269
    %271 = vmatmul.f32.gmra.mxu0 %v78
    %v272 = vpop.f32.mrf.mxu0
    %v273 = vadd.f32 %v45, %v272
    %274 = vmatmul.f32.gmra.mxu0 %v81
    %v275 = vpop.f32.mrf.mxu0
    %v276 = vadd.f32 %v45, %v275
    %277 = vmatmul.f32.gmra.mxu0 %v84
    %v278 = vpop.f32.mrf.mxu0
    %v279 = vadd.f32 %v45, %v278
    %280 = vmatmul.f32.gmra.mxu0 %v87
    %v281 = vpop.f32.mrf.mxu0
    %v282 = vadd.f32 %v45, %v281
    %283 = vmatmul.f32.gmra.mxu0 %v90
    %v284 = vpop.f32.mrf.mxu0
    %v285 = vadd.f32 %v45, %v284
    %286 = vmatmul.f32.gmra.mxu0 %v93
    %v287 = vpop.f32.mrf.mxu0
    %v288 = vadd.f32 %v45, %v287
    %289 = vmatmul.f32.gmra.mxu0 %v96
    %v290 = vpop.f32.mrf.mxu0
    %v291 = vadd.f32 %v45, %v290
    %292 = vdwg.mxu0
    %293 = vst [vmem:[#allocation2] sm:$0xff] %v116
    %294 = vst [vmem:[#allocation2 + $0x8] sm:$0xff] %v119
    %295 = vst [vmem:[#allocation2 + $0x10] sm:$0xff] %v122
    %296 = vst [vmem:[#allocation2 + $0x18] sm:$0xff] %v125
    %297 = vst [vmem:[#allocation2 + $0x20] sm:$0xff] %v128
    %298 = vst [vmem:[#allocation2 + $0x28] sm:$0xff] %v131
    %299 = vst [vmem:[#allocation2 + $0x30] sm:$0xff] %v134
    %300 = vst [vmem:[#allocation2 + $0x38] sm:$0xff] %v137
    %301 = vst [vmem:[#allocation2 + $0x40] sm:$0xff] %v140
    %302 = vst [vmem:[#allocation2 + $0x48] sm:$0xff] %v143
    %303 = vst [vmem:[#allocation2 + $0x50] sm:$0xff] %v146
    %304 = vst [vmem:[#allocation2 + $0x58] sm:$0xff] %v149
    %305 = vst [vmem:[#allocation2 + $0x60] sm:$0xff] %v152
    %306 = vst [vmem:[#allocation2 + $0x68] sm:$0xff] %v155
    %307 = vst [vmem:[#allocation2 + $0x70] sm:$0xff] %v158
    %308 = vst [vmem:[#allocation2 + $0x78] sm:$0xff] %v161
    %309 = vst [vmem:[#allocation4] sm:$0xff] %v181
    %310 = vst [vmem:[#allocation4 + $0x8] sm:$0xff] %v184
    %311 = vst [vmem:[#allocation4 + $0x10] sm:$0xff] %v187
    %312 = vst [vmem:[#allocation4 + $0x18] sm:$0xff] %v190
    %313 = vst [vmem:[#allocation4 + $0x20] sm:$0xff] %v193
    %314 = vst [vmem:[#allocation4 + $0x28] sm:$0xff] %v196
    %315 = vst [vmem:[#allocation4 + $0x30] sm:$0xff] %v199
    %316 = vst [vmem:[#allocation4 + $0x38] sm:$0xff] %v202
    %317 = vst [vmem:[#allocation4 + $0x40] sm:$0xff] %v205
    %318 = vst [vmem:[#allocation4 + $0x48] sm:$0xff] %v208
    %319 = vst [vmem:[#allocation4 + $0x50] sm:$0xff] %v211
    %320 = vst [vmem:[#allocation4 + $0x58] sm:$0xff] %v214
    %321 = vst [vmem:[#allocation4 + $0x60] sm:$0xff] %v217
    %322 = vst [vmem:[#allocation4 + $0x68] sm:$0xff] %v220
    %323 = vst [vmem:[#allocation4 + $0x70] sm:$0xff] %v223
    %324 = vst [vmem:[#allocation4 + $0x78] sm:$0xff] %v226
    %vm325 = vcmp.ge.f32.partialorder %v246, 0.0
    %vm326 = vcmp.ge.f32.partialorder %v249, 0.0
    %vm327 = vcmp.ge.f32.partialorder %v252, 0.0
    %vm328 = vcmp.ge.f32.partialorder %v255, 0.0
    %vm329 = vcmp.ge.f32.partialorder %v258, 0.0
    %vm330 = vcmp.ge.f32.partialorder %v261, 0.0
    %vm331 = vcmp.ge.f32.partialorder %v264, 0.0
    %vm332 = vcmp.ge.f32.partialorder %v267, 0.0
    %vm333 = vcmp.ge.f32.partialorder %v270, 0.0
    %vm334 = vcmp.ge.f32.partialorder %v273, 0.0
    %vm335 = vcmp.ge.f32.partialorder %v276, 0.0
    %vm336 = vcmp.ge.f32.partialorder %v279, 0.0
    %vm337 = vcmp.ge.f32.partialorder %v282, 0.0
    %vm338 = vcmp.ge.f32.partialorder %v285, 0.0
    %vm339 = vcmp.ge.f32.partialorder %v288, 0.0
    %vm340 = vcmp.ge.f32.partialorder %v291, 0.0
    %v341 = vmul.f32 %v246, 0.2
    %v342 = vmul.f32 %v249, 0.2
    %v343 = vmul.f32 %v252, 0.2
    %v344 = vmul.f32 %v255, 0.2
    %v345 = vmul.f32 %v258, 0.2
    %v346 = vmul.f32 %v261, 0.2
    %v347 = vmul.f32 %v264, 0.2
    %v348 = vmul.f32 %v267, 0.2
    %v349 = vmul.f32 %v270, 0.2
    %v350 = vmul.f32 %v273, 0.2
    %v351 = vmul.f32 %v276, 0.2
    %v352 = vmul.f32 %v279, 0.2
    %v353 = vmul.f32 %v282, 0.2
    %v354 = vmul.f32 %v285, 0.2
    %v355 = vmul.f32 %v288, 0.2
    %v356 = vmul.f32 %v291, 0.2
    %v357 = vsel %vm325, %v246, %v341
    %v358 = vsel %vm326, %v249, %v342
    %v359 = vsel %vm327, %v252, %v343
    %v360 = vsel %vm328, %v255, %v344
    %v361 = vsel %vm329, %v258, %v345
    %v362 = vsel %vm330, %v261, %v346
    %v363 = vsel %vm331, %v264, %v347
    %v364 = vsel %vm332, %v267, %v348
    %v365 = vsel %vm333, %v270, %v349
    %v366 = vsel %vm334, %v273, %v350
    %v367 = vsel %vm335, %v276, %v351
    %v368 = vsel %vm336, %v279, %v352
    %v369 = vsel %vm337, %v282, %v353
    %v370 = vsel %vm338, %v285, %v354
    %v371 = vsel %vm339, %v288, %v355
    %v372 = vsel %vm340, %v291, %v356
    %373 = vst [vmem:[#allocation6] sm:$0xff] %v357
    %374 = vst [vmem:[#allocation6 + $0x8] sm:$0xff] %v358
    %375 = vst [vmem:[#allocation6 + $0x10] sm:$0xff] %v359
    %376 = vst [vmem:[#allocation6 + $0x18] sm:$0xff] %v360
    %377 = vst [vmem:[#allocation6 + $0x20] sm:$0xff] %v361
    %378 = vst [vmem:[#allocation6 + $0x28] sm:$0xff] %v362
    %379 = vst [vmem:[#allocation6 + $0x30] sm:$0xff] %v363
    %380 = vst [vmem:[#allocation6 + $0x38] sm:$0xff] %v364
    %381 = vst [vmem:[#allocation6 + $0x40] sm:$0xff] %v365
    %382 = vst [vmem:[#allocation6 + $0x48] sm:$0xff] %v366
    %383 = vst [vmem:[#allocation6 + $0x50] sm:$0xff] %v367
    %384 = vst [vmem:[#allocation6 + $0x58] sm:$0xff] %v368
    %385 = vst [vmem:[#allocation6 + $0x60] sm:$0xff] %v369
    %386 = vst [vmem:[#allocation6 + $0x68] sm:$0xff] %v370
    %387 = vst [vmem:[#allocation6 + $0x70] sm:$0xff] %v371
    %388 = vst [vmem:[#allocation6 + $0x78] sm:$0xff] %v372
    // Predicated region
    $region14: #{tpu_custom_call.1} parent=1 // pred_check
      _
    $region15: #{tpu_custom_call.1} parent=1 // pred_check_branch
      %390 = sbr.rel (0) target = $region17
    $region16: #{tpu_custom_call.1} parent=1 // pred_region
      %392 = vsyncadd [#allocation3], 0
      %s393 = sshll.u32 [#allocation2], 4
      %s394 = int_to_ptr.vmem [resolvable:$true] %s393
      %s395 = sshll.u32 %s3, 4
      %s396 = int_to_ptr.hbm [resolvable:$true] %s395
      %401 = dma.vmem_to_hbm [thread:$0]  %s394, 2048, %s396, [#allocation3], 128, 128, 8
    $region17: #{tpu_custom_call.1} parent=1 // pred_fallthru
      _
    // Predicated region
    $region18: #{tpu_custom_call.1} parent=1 // pred_check
      _
    $region19: #{tpu_custom_call.1} parent=1 // pred_check_branch
      %403 = sbr.rel (0) target = $region21
    $region20: #{tpu_custom_call.1} parent=1 // pred_region
      %405 = vsyncadd [#allocation5], 0
      %s406 = sshll.u32 [#allocation4], 4
      %s407 = int_to_ptr.vmem [resolvable:$true] %s406
      %s408 = sshll.u32 %s4, 4
      %s409 = int_to_ptr.hbm [resolvable:$true] %s408
      %414 = dma.vmem_to_hbm [thread:$0]  %s407, 2048, %s409, [#allocation5], 128, 128, 8
    $region21: #{tpu_custom_call.1} parent=1 // pred_fallthru
      _
    // Predicated region
    $region22: #{tpu_custom_call.1} parent=1 // pred_check
      _
    $region23: #{tpu_custom_call.1} parent=1 // pred_check_branch
      %416 = sbr.rel (0) target = $region25
    $region24: #{tpu_custom_call.1} parent=1 // pred_region
      %418 = vsyncadd [#allocation5], 0
      %s419 = sshll.u32 [#allocation6], 4
      %s420 = int_to_ptr.vmem [resolvable:$true] %s419
      %s421 = sshll.u32 %s5, 4
      %s422 = int_to_ptr.hbm [resolvable:$true] %s421
      %427 = dma.vmem_to_hbm [thread:$0]  %s420, 2048, %s422, [#allocation5], 128, 128, 8
    $region25: #{tpu_custom_call.1} parent=1 // pred_fallthru
      _
    // Predicated region
    $region26: #{tpu_custom_call.1} parent=1 // pred_check
      _
    $region27: #{tpu_custom_call.1} parent=1 // pred_check_branch
      %429 = sbr.rel (0) target = $region29
    $region28: #{tpu_custom_call.1} parent=1 // pred_region
      %431 = dma.done [#allocation3], 2048
    $region29: #{tpu_custom_call.1} parent=1 // pred_fallthru
      _
    // Predicated region
    $region30: #{tpu_custom_call.1} parent=1 // pred_check
      _
    $region31: #{tpu_custom_call.1} parent=1 // pred_check_branch
      %433 = sbr.rel (0) target = $region33
    $region32: #{tpu_custom_call.1} parent=1 // pred_region
      %435 = dma.done [#allocation5], 2048
    $region33: #{tpu_custom_call.1} parent=1 // pred_fallthru
      _
    // Predicated region
    $region34: #{tpu_custom_call.1} parent=1 // pred_check
      _
    $region35: #{tpu_custom_call.1} parent=1 // pred_check_branch
      %437 = sbr.rel (0) target = $region37
    $region36: #{tpu_custom_call.1} parent=1 // pred_region
      %439 = dma.done [#allocation5], 2048
    $region37: #{tpu_custom_call.1} parent=1 // pred_fallthru
      _
    %440 = vsyncpa [#allocation3], 1
    %441 = vsyncpa [#allocation5], 1

</llo_original>
